<compile_context>
chip_gen: v5e
topology: v5e:2x2
jax: 0.10.0
libtpu: 0.0.40
codegen_flags: <defaults>
</compile_context>

<pallas_src>
import math
import functools

import jax
import jax.numpy as jnp
from jax import lax
from jax.experimental import pallas as pl
from jax.experimental.pallas import tpu as pltpu

# MXU operand dtype (accumulation is always f32).  bf16 is the perf default (v5e/v6e/v7x
# MXUs are native bf16); pass compute_dtype=jnp.float32 for exact parity with f32 refs.
COMPUTE_DTYPE = jnp.bfloat16
# Safe on v7x (64 MiB physical VMEM); on v6e this can be raised to ~96-112 MiB and tiles to 256.
VMEM_LIMIT_BYTES = 48 * 1024 * 1024
LN_EPS = 1e-5


# ----------------------------- in-kernel helpers -----------------------------

def _layernorm(x, gamma, beta, eps=LN_EPS):
    mu = jnp.mean(x, axis=-1, keepdims=True)
    var = jnp.mean((x - mu) ** 2, axis=-1, keepdims=True)
    return (x - mu) * lax.rsqrt(var + eps) * gamma + beta


def _erf(x):
    # Abramowitz & Stegun 7.1.26 rational approximation (|err| < 1.5e-7).
    a1, a2, a3, a4, a5 = 0.254829592, -0.284496736, 1.421413741, -1.453152027, 1.061405429
    p = 0.3275911
    s = jnp.sign(x)
    ax = jnp.abs(x)
    t = 1.0 / (1.0 + p * ax)
    poly = ((((a5 * t + a4) * t + a3) * t + a2) * t + a1) * t
    return s * (1.0 - poly * jnp.exp(-ax * ax))


def _gelu_exact(x):
    # exact-GELU semantics (PyTorch nn.GELU default); exp runs on the EUP.
    return 0.5 * x * (1.0 + _erf(x * (1.0 / math.sqrt(2.0))))


def _mm(a, b, compute_dtype, dn=None):
    # MXU matmul with (optionally) low-precision operands, f32 accumulation.
    a = a.astype(compute_dtype)
    b = b.astype(compute_dtype)
    if dn is None:
        return jnp.dot(a, b, preferred_element_type=jnp.float32)
    return lax.dot_general(a, b, dn, preferred_element_type=jnp.float32)


# --------------------------- stage 1: QKV prologue ----------------------------
# Runs once per (b, row-tile): LN1 + Q/K/V projections + relative-position query fold.
# Deletes the per-(qi,ki) recomputation of LN1 + wk/wv that the previous version did.

def qkv_proj_kernel(x_ref, g_ref, b_ref, wq_ref, wk_ref, wv_ref, wrelbd_ref,
                    rcb_ref, rpb_ref,
                    qc_ref, t_ref, k_ref, v_ref, *, scale, compute_dtype):
    xn = _layernorm(x_ref[0].astype(jnp.float32), g_ref[...], b_ref[...])
    q = _mm(xn, wq_ref[...], compute_dtype) * scale                 # (tm, H*Dk), f32
    k_ref[0] = _mm(xn, wk_ref[...], compute_dtype).astype(k_ref.dtype)
    v_ref[0] = _mm(xn, wv_ref[...], compute_dtype).astype(v_ref.dtype)
    # content query (q*scale + rel_content_bias), full-width lane-dense write
    qc_ref[0] = (q + rcb_ref[...]).astype(qc_ref.dtype)
    # folded rel query term: T[i, h*F+f] = sum_d (q*scale + rpb)[i, h*Dk+d] * wrel[f, h*Dk+d]
    # wrel is pre-block-diagonalised in the wrapper so this is one dense matmul.
    t_ref[0] = _mm(q + rpb_ref[...], wrelbd_ref[...], compute_dtype).astype(t_ref.dtype)


# --------------------- stage 2: flash attention + out-proj ---------------------

def attn_kernel(x_ref, qc_ref, t_ref, k_ref, v_ref, pos_ref, wo_ref, bo_ref,
                o_ref, m_sc, l_sc, acc_sc,
                *, heads, dim_key, rel_feats, compute_dtype):
    ki = pl.program_id(2)
    nk = pl.num_programs(2)

    @pl.when(ki == 0)
    def _init():
        m_sc[...] = jnp.full(m_sc.shape, -jnp.inf, m_sc.dtype)
        l_sc[...] = jnp.zeros(l_sc.shape, l_sc.dtype)
        acc_sc[...] = jnp.zeros(acc_sc.shape, acc_sc.dtype)

    k = k_ref[0]                                 # (tk, H*Dk)
    v = v_ref[0]                                 # (tk, H*Dk)
    qc = qc_ref[0]                               # (tq, H*Dk)
    t = t_ref[0].astype(jnp.float32)             # (tq, H*F)
    pos = pos_ref[0].astype(jnp.float32)         # (F, tq, tk) -- kv axis is lane-dense

    # TODO(synk): for heads >= ~8 use lax.fori_loop / a grid axis to bound vreg live ranges.
    for h in range(heads):
        lo = h * dim_key
        # content logits on the MXU: (q*scale + rcb) @ k^T
        content = _mm(qc[:, lo:lo + dim_key], k[:, lo:lo + dim_key],
                      compute_dtype, (((1,), (1,)), ((), ())))       # (tq, tk)
        # relative logits: unrolled lane-dense FMA over the F features
        t_h = t[:, h * rel_feats:(h + 1) * rel_feats]                # (tq, F)
        rel = t_h[:, 0:1] * pos[0]
        for f in range(1, rel_feats):
            rel = rel + t_h[:, f:f + 1] * pos[f]
        logits = content + rel

        # online softmax (flash style), all state f32
        m_prev = m_sc[h]
        m_new = jnp.maximum(m_prev, jnp.max(logits, axis=-1, keepdims=True))
        alpha = jnp.exp(m_prev - m_new)
        p = jnp.exp(logits - m_new)
        l_sc[h] = alpha * l_sc[h] + jnp.sum(p, axis=-1, keepdims=True)
        acc_sc[h] = alpha * acc_sc[h] + _mm(p, v[:, lo:lo + dim_key], compute_dtype)
        m_sc[h] = m_new

    @pl.when(ki == nk - 1)
    def _finalize():
        wo = wo_ref[...]
        attn_out = None
        for h in range(heads):
            lo = h * dim_key
            # exact divide (NOT pl.reciprocal(approx=True)) -- keeps parity with f32 reference
            normed = acc_sc[h] / l_sc[h]                             # (tq, Dk)
            contrib = _mm(normed, wo[lo:lo + dim_key, :], compute_dtype)   # (tq, DIM)
            attn_out = contrib if attn_out is None else attn_out + contrib
        o_ref[0] = (x_ref[0].astype(jnp.float32) + attn_out + bo_ref[...]).astype(o_ref.dtype)


# ------------------------ stage 3: LN2 + FFN epilogue --------------------------

def ffn_kernel(x_ref, g_ref, b_ref, w1_ref, b1_ref, w2_ref, b2_ref, o_ref, *, compute_dtype):
    x1 = x_ref[0].astype(jnp.float32)
    xn = _layernorm(x1, g_ref[...], b_ref[...])
    h1 = _gelu_exact(_mm(xn, w1_ref[...], compute_dtype) + b1_ref[...])
    o_ref[0] = (x1 + _mm(h1, w2_ref[...], compute_dtype) + b2_ref[...]).astype(o_ref.dtype)


# ------------------------------ wrapper (glue) --------------------------------

def _pick_tile(n, target=128):
    """Largest tile <= target that divides n and is sublane-aligned (or full n)."""
    # TODO(synk): awkward N (no multiple-of-8 divisor <= target) falls back to a full-N tile;
    # for production, pad N to a multiple of 128 with masking instead.
    if n <= target:
        return n
    for t in range(target, 7, -8):
        if n % t == 0:
            return t
    return n


def _const_spec(shape, ngrid):
    nd = len(shape)
    if ngrid == 2:
        return pl.BlockSpec(shape, lambda b, i, _nd=nd: (0,) * _nd)
    return pl.BlockSpec(shape, lambda b, i, j, _nd=nd: (0,) * _nd)


def _layer_pallas(x, pos_t, p, *, heads, dim_head, compute_dtype, tile_target=128):
    B, N, DIM = x.shape
    F = pos_t.shape[1]
    inner = heads * dim_head
    scale = dim_head ** (-0.5)

    # Flatten the small rel-position params / fold wrel into a block-diagonal matrix so the
    # prologue has no per-head loops or masked stores (done eagerly once per layer; tiny).
    rcb_flat = p['rcb'].reshape(1, inner)
    rpb_flat = p['rpb'].reshape(1, inner)
    wrel = p['wrel']                                                 # (F, H*Dk)
    wrel_bd = jnp.zeros((inner, heads * F), jnp.float32)
    for h in range(heads):
        wrel_bd = wrel_bd.at[h * dim_head:(h + 1) * dim_head,
                             h * F:(h + 1) * F].set(
            wrel[:, h * dim_head:(h + 1) * dim_head].T)

    tm = _pick_tile(N, tile_target)
    nm = N // tm

    def row_spec(last):
        return pl.BlockSpec((1, tm, last), lambda b, i: (b, i, 0))

    # ---- stage 1: LN1 + Q/K/V projections + rel-query fold (once per row) ----
    stage1_weights = (p['ln1_g'], p['ln1_b'], p['wq'], p['wk'], p['wv'],
                      wrel_bd, rcb_flat, rpb_flat)
    qc, t, k, v = pl.pallas_call(
        functools.partial(qkv_proj_kernel, scale=scale, compute_dtype=compute_dtype),
        out_shape=(jax.ShapeDtypeStruct((B, N, inner), compute_dtype),
                   jax.ShapeDtypeStruct((B, N, heads * F), compute_dtype),
                   jax.ShapeDtypeStruct((B, N, inner), compute_dtype),
                   jax.ShapeDtypeStruct((B, N, inner), compute_dtype)),
        grid=(B, nm),
        in_specs=[row_spec(DIM)] + [_const_spec(a.shape, 2) for a in stage1_weights],
        out_specs=(row_spec(inner), row_spec(heads * F), row_spec(inner), row_spec(inner)),
        compiler_params=pltpu.CompilerParams(
            dimension_semantics=("parallel", "parallel"),
            vmem_limit_bytes=VMEM_LIMIT_BYTES),
    )(x, *stage1_weights)

    # ---- stage 2: flash attention + output projection + residual ----
    tq = _pick_tile(N, tile_target)
    tk = _pick_tile(N, tile_target)
    nq, nk = N // tq, N // tk

    attn_in_specs = [
        pl.BlockSpec((1, tq, DIM), lambda b, qi, ki: (b, qi, 0)),          # x (residual)
        pl.BlockSpec((1, tq, inner), lambda b, qi, ki: (b, qi, 0)),        # qc
        pl.BlockSpec((1, tq, heads * F), lambda b, qi, ki: (b, qi, 0)),    # folded rel query T
        pl.BlockSpec((1, tk, inner), lambda b, qi, ki: (b, ki, 0)),        # K
        pl.BlockSpec((1, tk, inner), lambda b, qi, ki: (b, ki, 0)),        # V
        pl.BlockSpec((1, F, tq, tk), lambda b, qi, ki: (b, 0, qi, ki)),    # positions (kv lane-dense)
        _const_spec(p['wo'].shape, 3),
        _const_spec(p['bo'].shape, 3),
    ]
    x1 = pl.pallas_call(
        functools.partial(attn_kernel, heads=heads, dim_key=dim_head,
                          rel_feats=F, compute_dtype=compute_dtype),
        out_shape=jax.ShapeDtypeStruct((B, N, DIM), x.dtype),
        grid=(B, nq, nk),                                                  # kv (reduction) innermost
        in_specs=attn_in_specs,
        out_specs=pl.BlockSpec((1, tq, DIM), lambda b, qi, ki: (b, qi, 0)),
        scratch_shapes=[pltpu.VMEM((heads, tq, 1), jnp.float32),           # running max
                        pltpu.VMEM((heads, tq, 1), jnp.float32),           # running denom
                        pltpu.VMEM((heads, tq, dim_head), jnp.float32)],   # running accumulator
        compiler_params=pltpu.CompilerParams(
            dimension_semantics=("parallel", "parallel", "arbitrary"),
            vmem_limit_bytes=VMEM_LIMIT_BYTES),
    )(x, qc, t, k, v, pos_t, p['wo'], p['bo'])

    # ---- stage 3: LN2 + FFN + residual (separate call: bounds weight residency on v7x) ----
    stage3_weights = (p['ln2_g'], p['ln2_b'], p['w1'], p['b1'], p['w2'], p['b2'])
    out = pl.pallas_call(
        functools.partial(ffn_kernel, compute_dtype=compute_dtype),
        out_shape=jax.ShapeDtypeStruct((B, N, DIM), x.dtype),
        grid=(B, nm),
        in_specs=[row_spec(DIM)] + [_const_spec(a.shape, 2) for a in stage3_weights],
        out_specs=row_spec(DIM),
        compiler_params=pltpu.CompilerParams(
            dimension_semantics=("parallel", "parallel"),
            vmem_limit_bytes=VMEM_LIMIT_BYTES),
    )(x1, *stage3_weights)
    return out


def transformer_forward(x, positions, params, *, heads, dim_head,
                        compute_dtype=COMPUTE_DTYPE, tile_target=128):
    # positions is layer-invariant: transpose ONCE to (B, F, N, N) so the kv axis is the
    # 128-lane axis of the rel FMA and the dominant HBM stream is lane-dense; cast to bf16
    # when computing in bf16 (halves the stream).
    pos_dtype = jnp.bfloat16 if compute_dtype == jnp.bfloat16 else positions.dtype
    pos_t = jnp.transpose(positions, (0, 3, 1, 2)).astype(pos_dtype)
    for p in params:
        x = _layer_pallas(x, pos_t, p, heads=heads, dim_head=dim_head,
                          compute_dtype=compute_dtype, tile_target=tile_target)
    return x


# ------------------------------ reference (JAX) --------------------------------

def _ref_layernorm(x, g, b, eps=LN_EPS):
    mu = jnp.mean(x, axis=-1, keepdims=True)
    var = jnp.mean((x - mu) ** 2, axis=-1, keepdims=True)
    return (x - mu) / jnp.sqrt(var + eps) * g + b


def reference_forward(x, positions, params, heads, dim_head):
    scale = dim_head ** (-0.5)
    B, N, DIM = x.shape
    for p in params:
        xn = _ref_layernorm(x, p['ln1_g'], p['ln1_b'])
        q = xn @ p['wq']
        k = xn @ p['wk']
        v = xn @ p['wv']

        def split(t):
            return t.reshape(B, N, heads, dim_head).transpose(0, 2, 1, 3)

        q, k, v = split(q), split(k), split(v)
        q = q * scale
        rcb = p['rcb'][None, :, None, :]
        rpb = p['rpb'][None, :, None, :]
        content = jnp.einsum('bhid,bhjd->bhij', q + rcb, k)
        relk = jnp.einsum('bnmf,fe->bnme', positions, p['wrel'])
        relk = relk.reshape(B, N, N, heads, dim_head).transpose(0, 3, 1, 2, 4)
        rel = jnp.einsum('bhid,bhijd->bhij', q + rpb, relk)
        attn = jax.nn.softmax(content + rel, axis=-1)
        out = jnp.einsum('bhij,bhjd->bhid', attn, v)
        out = out.transpose(0, 2, 1, 3).reshape(B, N, heads * dim_head)
        x = x + (out @ p['wo'] + p['bo'])

        xn2 = _ref_layernorm(x, p['ln2_g'], p['ln2_b'])
        h1 = jax.nn.gelu(xn2 @ p['w1'] + p['b1'], approximate=False)
        x = x + (h1 @ p['w2'] + p['b2'])
    return x


# ------------------------------ params / main ----------------------------------

def init_params(key, depth, dim, heads, dim_head, num_rel_pos_features, mlp_dim):
    inner = heads * dim_head
    params = []

    def uni(k, shape, fan_in):
        b = 1.0 / math.sqrt(fan_in)
        return jax.random.uniform(k, shape, jnp.float32, -b, b)

    for _ in range(depth):
        keys = jax.random.split(key, 12)
        key = keys[0]
        params.append({
            'ln1_g': jnp.ones((1, dim), jnp.float32),
            'ln1_b': jnp.zeros((1, dim), jnp.float32),
            'wq': uni(keys[1], (dim, inner), dim),
            'wk': uni(keys[2], (dim, inner), dim),
            'wv': uni(keys[3], (dim, inner), dim),
            'wrel': uni(keys[4], (num_rel_pos_features, inner), num_rel_pos_features),
            'rcb': jax.random.normal(keys[5], (heads, dim_head), jnp.float32),
            'rpb': jax.random.normal(keys[6], (heads, dim_head), jnp.float32),
            # NOTE: the PyTorch module zero-inits to_out; randomized here so the attention
            # path actually contributes to the output under test.
            'wo': uni(keys[7], (inner, dim), inner),
            'bo': jnp.zeros((1, dim), jnp.float32),
            'ln2_g': jnp.ones((1, dim), jnp.float32),
            'ln2_b': jnp.zeros((1, dim), jnp.float32),
            'w1': uni(keys[8], (dim, mlp_dim), dim),
            'b1': uni(keys[9], (1, mlp_dim), dim),
            'w2': uni(keys[10], (mlp_dim, dim), mlp_dim),
            'b2': uni(keys[11], (1, dim), mlp_dim),
        })
    return params


if __name__ == "__main__":
    B, N, DIM = 2, 8, 32
    heads, dim_head = 2, 16
    F, mlp_dim, depth = 8, 64, 2

    key = jax.random.PRNGKey(0)
    kx, kp, kparams = jax.random.split(key, 3)
    x = jax.random.normal(kx, (B, N, DIM), jnp.float32)
    positions = jax.random.normal(kp, (B, N, N, F), jnp.float32)
    params = init_params(kparams, depth, DIM, heads, dim_head, F, mlp_dim)

    ref = reference_forward(x, positions, params, heads, dim_head)

    # Strict parity run: f32 MXU operands (exact divide in softmax, erf approx ~1e-7).
    out_f32 = jax.block_until_ready(
        transformer_forward(x, positions, params, heads=heads, dim_head=dim_head,
                            compute_dtype=jnp.float32))
    assert out_f32.shape == (B, N, DIM)
    err_f32 = float(jnp.max(jnp.abs(out_f32 - ref)))
    assert jnp.allclose(out_f32, ref, atol=2e-3, rtol=2e-3), err_f32

    # Perf-default run: bf16 MXU operands / bf16 positions stream, f32 accumulation.
    # Looser tolerance because the reference is pure f32.
    out_bf16 = jax.block_until_ready(
        transformer_forward(x, positions, params, heads=heads, dim_head=dim_head,
                            compute_dtype=jnp.bfloat16))
    err_bf16 = float(jnp.max(jnp.abs(out_bf16 - ref)))
    assert jnp.allclose(out_bf16, ref, atol=1e-1, rtol=5e-2), err_bf16

    print("KERNEL_OK")
</pallas_src>

<mosaic_0001>
module attributes {stable_mosaic.version = 11 : i64} {
  func.func @qkv_proj_kernel(%arg0: i32, %arg1: i32, %arg2: memref<1x8x32xf32, #tpu.memory_space<vmem>>, %arg3: memref<1x32xf32, #tpu.memory_space<vmem>>, %arg4: memref<1x32xf32, #tpu.memory_space<vmem>>, %arg5: memref<32x32xf32, #tpu.memory_space<vmem>>, %arg6: memref<32x32xf32, #tpu.memory_space<vmem>>, %arg7: memref<32x32xf32, #tpu.memory_space<vmem>>, %arg8: memref<32x16xf32, #tpu.memory_space<vmem>>, %arg9: memref<1x32xf32, #tpu.memory_space<vmem>>, %arg10: memref<1x32xf32, #tpu.memory_space<vmem>>, %arg11: memref<1x8x32xf32, #tpu.memory_space<vmem>>, %arg12: memref<1x8x16xf32, #tpu.memory_space<vmem>>, %arg13: memref<1x8x32xf32, #tpu.memory_space<vmem>>, %arg14: memref<1x8x32xf32, #tpu.memory_space<vmem>>) attributes {dimension_semantics = [#tpu.dimension_semantics<parallel>, #tpu.dimension_semantics<parallel>], iteration_bounds = array<i64: 2, 1>, scalar_prefetch = 0 : i64, scratch_operands = 0 : i64, tpu.core_type = #tpu.core_type<tc>, window_params = [{transform_indices = @transform_0, window_bounds = array<i64: 1, 8, 32>}, {pipeline_mode = #tpu.pipeline_mode<synchronous>, transform_indices = @transform_1, window_bounds = array<i64: 1, 32>}, {pipeline_mode = #tpu.pipeline_mode<synchronous>, transform_indices = @transform_2, window_bounds = array<i64: 1, 32>}, {pipeline_mode = #tpu.pipeline_mode<synchronous>, transform_indices = @transform_3, window_bounds = array<i64: 32, 32>}, {pipeline_mode = #tpu.pipeline_mode<synchronous>, transform_indices = @transform_4, window_bounds = array<i64: 32, 32>}, {pipeline_mode = #tpu.pipeline_mode<synchronous>, transform_indices = @transform_5, window_bounds = array<i64: 32, 32>}, {pipeline_mode = #tpu.pipeline_mode<synchronous>, transform_indices = @transform_6, window_bounds = array<i64: 32, 16>}, {pipeline_mode = #tpu.pipeline_mode<synchronous>, transform_indices = @transform_7, window_bounds = array<i64: 1, 32>}, {pipeline_mode = #tpu.pipeline_mode<synchronous>, transform_indices = @transform_8, window_bounds = array<i64: 1, 32>}, {transform_indices = @transform_9, window_bounds = array<i64: 1, 8, 32>}, {transform_indices = @transform_10, window_bounds = array<i64: 1, 8, 16>}, {transform_indices = @transform_11, window_bounds = array<i64: 1, 8, 32>}, {transform_indices = @transform_12, window_bounds = array<i64: 1, 8, 32>}]} {
    %c0 = arith.constant 0 : index
    %c0_0 = arith.constant 0 : index
    %c0_1 = arith.constant 0 : index
    %0 = vector.load %arg2[%c0, %c0_0, %c0_1] : memref<1x8x32xf32, #tpu.memory_space<vmem>>, vector<1x8x32xf32>
    %1 = vector.shape_cast %0 : vector<1x8x32xf32> to vector<8x32xf32>
    %c0_2 = arith.constant 0 : index
    %c0_3 = arith.constant 0 : index
    %2 = vector.load %arg3[%c0_2, %c0_3] : memref<1x32xf32, #tpu.memory_space<vmem>>, vector<1x32xf32>
    %c0_4 = arith.constant 0 : index
    %c0_5 = arith.constant 0 : index
    %3 = vector.load %arg4[%c0_4, %c0_5] : memref<1x32xf32, #tpu.memory_space<vmem>>, vector<1x32xf32>
    %cst = arith.constant dense<0.000000e+00> : vector<8xf32>
    %4 = vector.multi_reduction <add>, %1, %cst [1] : vector<8x32xf32> to vector<8xf32>
    %5 = vector.shape_cast %4 : vector<8xf32> to vector<8x1xf32>
    %cst_6 = arith.constant 3.200000e+01 : f32
    %6 = vector.broadcast %cst_6 : f32 to vector<8x1xf32>
    %7 = arith.divf %5, %6 : vector<8x1xf32>
    %8 = vector.broadcast %7 : vector<8x1xf32> to vector<8x32xf32>
    %9 = arith.subf %1, %8 : vector<8x32xf32>
    %10 = arith.mulf %9, %9 : vector<8x32xf32>
    %cst_7 = arith.constant dense<0.000000e+00> : vector<8xf32>
    %11 = vector.multi_reduction <add>, %10, %cst_7 [1] : vector<8x32xf32> to vector<8xf32>
    %12 = vector.shape_cast %11 : vector<8xf32> to vector<8x1xf32>
    %cst_8 = arith.constant 3.200000e+01 : f32
    %13 = vector.broadcast %cst_8 : f32 to vector<8x1xf32>
    %14 = arith.divf %12, %13 : vector<8x1xf32>
    %15 = vector.broadcast %7 : vector<8x1xf32> to vector<8x32xf32>
    %16 = arith.subf %1, %15 : vector<8x32xf32>
    %cst_9 = arith.constant 9.99999974E-6 : f32
    %17 = vector.broadcast %cst_9 : f32 to vector<8x1xf32>
    %18 = arith.addf %14, %17 : vector<8x1xf32>
    %19 = math.rsqrt %18 : vector<8x1xf32>
    %20 = vector.broadcast %19 : vector<8x1xf32> to vector<8x32xf32>
    %21 = arith.mulf %16, %20 : vector<8x32xf32>
    %22 = vector.broadcast %2 : vector<1x32xf32> to vector<8x32xf32>
    %23 = arith.mulf %21, %22 : vector<8x32xf32>
    %24 = vector.broadcast %3 : vector<1x32xf32> to vector<8x32xf32>
    %25 = arith.addf %23, %24 : vector<8x32xf32>
    %c0_10 = arith.constant 0 : index
    %c0_11 = arith.constant 0 : index
    %26 = vector.load %arg5[%c0_10, %c0_11] : memref<32x32xf32, #tpu.memory_space<vmem>>, vector<32x32xf32>
    %cst_12 = arith.constant dense<0.000000e+00> : vector<8x32xf32>
    %27 = tpu.matmul %25, %26, %cst_12 {dimension_numbers = #tpu.dot_dimension_numbers<[1], [0], [0], [1], [0, 0, 1, 1], [], []>} : vector<8x32xf32>, vector<32x32xf32>, vector<8x32xf32> -> vector<8x32xf32>
    %cst_13 = arith.constant 2.500000e-01 : f32
    %28 = vector.broadcast %cst_13 : f32 to vector<8x32xf32>
    %29 = arith.mulf %27, %28 : vector<8x32xf32>
    %c0_14 = arith.constant 0 : index
    %c0_15 = arith.constant 0 : index
    %30 = vector.load %arg6[%c0_14, %c0_15] : memref<32x32xf32, #tpu.memory_space<vmem>>, vector<32x32xf32>
    %cst_16 = arith.constant dense<0.000000e+00> : vector<8x32xf32>
    %31 = tpu.matmul %25, %30, %cst_16 {dimension_numbers = #tpu.dot_dimension_numbers<[1], [0], [0], [1], [0, 0, 1, 1], [], []>} : vector<8x32xf32>, vector<32x32xf32>, vector<8x32xf32> -> vector<8x32xf32>
    %c0_17 = arith.constant 0 : index
    %c0_18 = arith.constant 0 : index
    %c0_19 = arith.constant 0 : index
    %32 = vector.load %arg13[%c0_17, %c0_18, %c0_19] : memref<1x8x32xf32, #tpu.memory_space<vmem>>, vector<1x8x32xf32>
    %33 = vector.shape_cast %32 : vector<1x8x32xf32> to vector<8x32xf32>
    %34 = vector.shape_cast %31 : vector<8x32xf32> to vector<1x8x32xf32>
    tpu.vector_store %arg13[%c0_17, %c0_18, %c0_19], %34 {strides = array<i32>} : memref<1x8x32xf32, #tpu.memory_space<vmem>>, vector<1x8x32xf32>,
    %c0_20 = arith.constant 0 : index
    %c0_21 = arith.constant 0 : index
    %35 = vector.load %arg7[%c0_20, %c0_21] : memref<32x32xf32, #tpu.memory_space<vmem>>, vector<32x32xf32>
    %cst_22 = arith.constant dense<0.000000e+00> : vector<8x32xf32>
    %36 = tpu.matmul %25, %35, %cst_22 {dimension_numbers = #tpu.dot_dimension_numbers<[1], [0], [0], [1], [0, 0, 1, 1], [], []>} : vector<8x32xf32>, vector<32x32xf32>, vector<8x32xf32> -> vector<8x32xf32>
    %c0_23 = arith.constant 0 : index
    %c0_24 = arith.constant 0 : index
    %c0_25 = arith.constant 0 : index
    %37 = vector.load %arg14[%c0_23, %c0_24, %c0_25] : memref<1x8x32xf32, #tpu.memory_space<vmem>>, vector<1x8x32xf32>
    %38 = vector.shape_cast %37 : vector<1x8x32xf32> to vector<8x32xf32>
    %39 = vector.shape_cast %36 : vector<8x32xf32> to vector<1x8x32xf32>
    tpu.vector_store %arg14[%c0_23, %c0_24, %c0_25], %39 {strides = array<i32>} : memref<1x8x32xf32, #tpu.memory_space<vmem>>, vector<1x8x32xf32>,
    %c0_26 = arith.constant 0 : index
    %c0_27 = arith.constant 0 : index
    %40 = vector.load %arg9[%c0_26, %c0_27] : memref<1x32xf32, #tpu.memory_space<vmem>>, vector<1x32xf32>
    %41 = vector.broadcast %40 : vector<1x32xf32> to vector<8x32xf32>
    %42 = arith.addf %29, %41 : vector<8x32xf32>
    %c0_28 = arith.constant 0 : index
    %c0_29 = arith.constant 0 : index
    %c0_30 = arith.constant 0 : index
    %43 = vector.load %arg11[%c0_28, %c0_29, %c0_30] : memref<1x8x32xf32, #tpu.memory_space<vmem>>, vector<1x8x32xf32>
    %44 = vector.shape_cast %43 : vector<1x8x32xf32> to vector<8x32xf32>
    %45 = vector.shape_cast %42 : vector<8x32xf32> to vector<1x8x32xf32>
    tpu.vector_store %arg11[%c0_28, %c0_29, %c0_30], %45 {strides = array<i32>} : memref<1x8x32xf32, #tpu.memory_space<vmem>>, vector<1x8x32xf32>,
    %c0_31 = arith.constant 0 : index
    %c0_32 = arith.constant 0 : index
    %46 = vector.load %arg10[%c0_31, %c0_32] : memref<1x32xf32, #tpu.memory_space<vmem>>, vector<1x32xf32>
    %47 = vector.broadcast %46 : vector<1x32xf32> to vector<8x32xf32>
    %48 = arith.addf %29, %47 : vector<8x32xf32>
    %c0_33 = arith.constant 0 : index
    %c0_34 = arith.constant 0 : index
    %49 = vector.load %arg8[%c0_33, %c0_34] : memref<32x16xf32, #tpu.memory_space<vmem>>, vector<32x16xf32>
    %cst_35 = arith.constant dense<0.000000e+00> : vector<8x16xf32>
    %50 = tpu.matmul %48, %49, %cst_35 {dimension_numbers = #tpu.dot_dimension_numbers<[1], [0], [0], [1], [0, 0, 1, 1], [], []>} : vector<8x32xf32>, vector<32x16xf32>, vector<8x16xf32> -> vector<8x16xf32>
    %c0_36 = arith.constant 0 : index
    %c0_37 = arith.constant 0 : index
    %c0_38 = arith.constant 0 : index
    %51 = vector.load %arg12[%c0_36, %c0_37, %c0_38] : memref<1x8x16xf32, #tpu.memory_space<vmem>>, vector<1x8x16xf32>
    %52 = vector.shape_cast %51 : vector<1x8x16xf32> to vector<8x16xf32>
    %53 = vector.shape_cast %50 : vector<8x16xf32> to vector<1x8x16xf32>
    tpu.vector_store %arg12[%c0_36, %c0_37, %c0_38], %53 {strides = array<i32>} : memref<1x8x16xf32, #tpu.memory_space<vmem>>, vector<1x8x16xf32>,
    return
  }
  func.func @transform_0(%arg0: i32, %arg1: i32) -> (i32, i32, i32) {
    %c0_i32 = arith.constant 0 : i32
    %c0_i32_0 = arith.constant 0 : i32
    return %arg0, %arg1, %c0_i32 : i32, i32, i32
  }
  func.func @transform_1(%arg0: i32, %arg1: i32) -> (i32, i32) {
    %c0_i32 = arith.constant 0 : i32
    %c0_i32_0 = arith.constant 0 : i32
    %c0_i32_1 = arith.constant 0 : i32
    return %c0_i32, %c0_i32_0 : i32, i32
  }
  func.func @transform_2(%arg0: i32, %arg1: i32) -> (i32, i32) {
    %c0_i32 = arith.constant 0 : i32
    %c0_i32_0 = arith.constant 0 : i32
    %c0_i32_1 = arith.constant 0 : i32
    return %c0_i32, %c0_i32_0 : i32, i32
  }
  func.func @transform_3(%arg0: i32, %arg1: i32) -> (i32, i32) {
    %c0_i32 = arith.constant 0 : i32
    %c0_i32_0 = arith.constant 0 : i32
    %c0_i32_1 = arith.constant 0 : i32
    return %c0_i32, %c0_i32_0 : i32, i32
  }
  func.func @transform_4(%arg0: i32, %arg1: i32) -> (i32, i32) {
    %c0_i32 = arith.constant 0 : i32
    %c0_i32_0 = arith.constant 0 : i32
    %c0_i32_1 = arith.constant 0 : i32
    return %c0_i32, %c0_i32_0 : i32, i32
  }
  func.func @transform_5(%arg0: i32, %arg1: i32) -> (i32, i32) {
    %c0_i32 = arith.constant 0 : i32
    %c0_i32_0 = arith.constant 0 : i32
    %c0_i32_1 = arith.constant 0 : i32
    return %c0_i32, %c0_i32_0 : i32, i32
  }
  func.func @transform_6(%arg0: i32, %arg1: i32) -> (i32, i32) {
    %c0_i32 = arith.constant 0 : i32
    %c0_i32_0 = arith.constant 0 : i32
    %c0_i32_1 = arith.constant 0 : i32
    return %c0_i32, %c0_i32_0 : i32, i32
  }
  func.func @transform_7(%arg0: i32, %arg1: i32) -> (i32, i32) {
    %c0_i32 = arith.constant 0 : i32
    %c0_i32_0 = arith.constant 0 : i32
    %c0_i32_1 = arith.constant 0 : i32
    return %c0_i32, %c0_i32_0 : i32, i32
  }
  func.func @transform_8(%arg0: i32, %arg1: i32) -> (i32, i32) {
    %c0_i32 = arith.constant 0 : i32
    %c0_i32_0 = arith.constant 0 : i32
    %c0_i32_1 = arith.constant 0 : i32
    return %c0_i32, %c0_i32_0 : i32, i32
  }
  func.func @transform_9(%arg0: i32, %arg1: i32) -> (i32, i32, i32) {
    %c0_i32 = arith.constant 0 : i32
    %c0_i32_0 = arith.constant 0 : i32
    return %arg0, %arg1, %c0_i32 : i32, i32, i32
  }
  func.func @transform_10(%arg0: i32, %arg1: i32) -> (i32, i32, i32) {
    %c0_i32 = arith.constant 0 : i32
    %c0_i32_0 = arith.constant 0 : i32
    return %arg0, %arg1, %c0_i32 : i32, i32, i32
  }
  func.func @transform_11(%arg0: i32, %arg1: i32) -> (i32, i32, i32) {
    %c0_i32 = arith.constant 0 : i32
    %c0_i32_0 = arith.constant 0 : i32
    return %arg0, %arg1, %c0_i32 : i32, i32, i32
  }
  func.func @transform_12(%arg0: i32, %arg1: i32) -> (i32, i32, i32) {
    %c0_i32 = arith.constant 0 : i32
    %c0_i32_0 = arith.constant 0 : i32
    return %arg0, %arg1, %c0_i32 : i32, i32, i32
  }
}

</mosaic_0001>

<llo_original>
// kernel: tpu_custom_call.1
$region0: #{tpu_custom_call.1}
  #allocation0 [shape = 'u32[]', space=smem, size = 0x4, offset = 0x4, fixed_abs, tag = 'smem constant byte address 0x4 - core index']
  #allocation1 [shape = 'u32[72,128]{1,0:T(1,128)}', space=vmem, size = 0x9000, scoped, tag = 'internal scratch']
  %s0 = inlined_call_operand.vmem [shape: f32[2,8,32], index: 0, kind: input, shape index: {}]
  %s1 = inlined_call_operand.vmem [shape: f32[1,32], index: 1, kind: input, shape index: {}]
  %s2 = inlined_call_operand.vmem [shape: f32[1,32], index: 2, kind: input, shape index: {}]
  %s3 = inlined_call_operand.vmem [shape: f32[32,32], index: 3, kind: input, shape index: {}]
  %s4 = inlined_call_operand.hbm [shape: f32[32,32], index: 4, kind: input, shape index: {}]
  %s5 = inlined_call_operand.hbm [shape: f32[32,32], index: 5, kind: input, shape index: {}]
  %s6 = inlined_call_operand.vmem [shape: f32[32,16], index: 6, kind: input, shape index: {}]
  %s7 = inlined_call_operand.vmem [shape: f32[1,32], index: 7, kind: input, shape index: {}]
  %s8 = inlined_call_operand.vmem [shape: f32[1,32], index: 8, kind: input, shape index: {}]
  %s9 = inlined_call_operand.hbm [shape: f32[2,8,32], index: 9, kind: output, shape index: {0}]
  %s10 = inlined_call_operand.hbm [shape: f32[2,8,16], index: 10, kind: output, shape index: {1}]
  %s11 = inlined_call_operand.hbm [shape: f32[2,8,32], index: 11, kind: output, shape index: {2}]
  %s12 = inlined_call_operand.hbm [shape: f32[2,8,32], index: 12, kind: output, shape index: {3}]
  %13 = xla_tuple %s9, %s10, %s11, %s12
  %s14 = sld [smem:[#allocation0]]
  $region101: #{tpu_custom_call.1} parent=0
    _
  %s16 = ssub.s32 1, %s14
  %s17 = scalar_select 0, %s16, %s14
  $region1: #{tpu_custom_call.1} parent=0
    #allocation2 [shape = 'u8[16384]{0}', space=vmem, size = 0x4000, scoped, tag = 'input window, operand 4, single buffered']
    #allocation3 [shape = 's32[2]{0}', space=sflag, size = 0x8, scoped, tag = 'scoped memory for tpu_custom_call.1']
    #allocation4 [shape = 's32[2]{0}', space=sflag, size = 0x8, scoped, tag = 'scoped memory for tpu_custom_call.1']
    #allocation5 [shape = 'u8[16384]{0}', space=vmem, size = 0x4000, scoped, tag = 'input window, operand 5, single buffered']
    #allocation6 [shape = 's32[1]{0}', space=sflag, size = 0x4, scoped, tag = 'scoped memory for tpu_custom_call.1']
    #allocation7 [shape = 'u8[8192]{0}', space=vmem, size = 0x2000, scoped, tag = 'output window, operand 0']
    #allocation8 [shape = 'u8[8192]{0}', space=vmem, size = 0x2000, scoped, tag = 'output window, operand 1']
    #allocation9 [shape = 's32[2]{0}', space=sflag, size = 0x8, scoped, tag = 'scoped memory for tpu_custom_call.1']
    #allocation10 [shape = 'u8[8192]{0}', space=vmem, size = 0x2000, scoped, tag = 'output window, operand 2']
    #allocation11 [shape = 'u8[8192]{0}', space=vmem, size = 0x2000, scoped, tag = 'output window, operand 3']
    #allocation12 [shape = 's32[2]{0}', space=sflag, size = 0x8, scoped, tag = 'scoped memory for tpu_custom_call.1']
    %18 = vsyncpa [#allocation3], 0
    %19 = vsyncpa [#allocation6], 0
    %20 = vsyncpa [#allocation4], 0
    %s21 = scalar_lea.sflag [#allocation4], 1
    %22 = vsyncpa %s21, 0
    %23 = vsyncpa [#allocation9], 0
    %s24 = scalar_lea.sflag [#allocation9], 1
    %25 = vsyncpa %s24, 0
    %26 = vsyncpa [#allocation12], 0
    %s27 = scalar_lea.sflag [#allocation12], 1
    %28 = vsyncpa %s27, 0
    loop: start=0, step=1, limit=4
    $region2: #{tpu_custom_call.1} parent=1 // loop_pre_header
      _
    $region3: #{tpu_custom_call.1} parent=1 // loop_header
      %s30 = sphi 0, %s34
      %p31 = scmp.ge.s32.totalorder %s30, 4
      %s37 = sphi 0, %s49
      %s38 = sphi 0, %s45
      %s39 = sphi 0, %s37
      %s40 = sphi 0, %s38
      %s41 = sphi 0, %s39
      %s42 = sphi 0, %s40
      %s54 = sphi 0, %s56
      %s57 = sphi 0, %s54
      %s58 = sphi 0, %s57
      %s74 = sphi 0, %s58
      %s78 = sphi 0, %s78
      %s80 = sphi 0, %s78
      %s81 = sphi 0, %s80
      %s95 = sphi 0, %s81
      %s99 = sphi 0, %s99
      %s101 = sphi 0, %s99
      %s102 = sphi 0, %s101
      %s116 = sphi 0, %s102
      %s120 = sphi 0, %s120
      %s122 = sphi 0, %s120
      %s123 = sphi 0, %s122
      %s137 = sphi 0, %s123
      %s141 = sphi 0, %s141
      %s143 = sphi 0, %s141
      %s144 = sphi 0, %s143
      %s158 = sphi 0, %s144
      %s162 = sphi 0, %s162
      %s164 = sphi 0, %s162
      %s165 = sphi 0, %s164
      %s179 = sphi 0, %s165
      %s183 = sphi 0, %s183
      %s185 = sphi 0, %s183
      %s186 = sphi 0, %s185
      %s200 = sphi 0, %s186
      %s204 = sphi 0, %s204
      %s206 = sphi 0, %s204
      %s207 = sphi 0, %s206
      %s221 = sphi 0, %s207
      %s225 = sphi 0, %s225
      %s227 = sphi 0, %s225
      %s228 = sphi 0, %s227
      %s242 = sphi 0, %s228
      %s250 = sphi 0, %s252
      %s253 = sphi 0, %s250
      %s254 = sphi 0, %s253
      %s270 = sphi 0, %s254
      %s278 = sphi 0, %s280
      %s281 = sphi 0, %s278
      %s282 = sphi 0, %s281
      %s298 = sphi 0, %s282
      %s306 = sphi 0, %s308
      %s309 = sphi 0, %s306
      %s310 = sphi 0, %s309
      %s326 = sphi 0, %s310
      %s334 = sphi 0, %s336
      %s337 = sphi 0, %s334
      %s338 = sphi 0, %s337
      %s354 = sphi 0, %s338
    $region4: #{tpu_custom_call.1} parent=1 // loop_header_branch
      %33 = sbr.rel (%p31) target = $region8
    $region5: #{tpu_custom_call.1} parent=1 // loop_body
      %s35 = ssub.s32 %s30, 1
      %s36 = ssub.s32 %s30, 2
      %s43 = sadd.s32 1, %s38
      %p44 = scmp.ge.s32.totalorder %s43, 1
      %s45 = scalar_select %p44, 0, %s43
      %s46 = sadd.s32 1, %s37
      %s47 = scalar_select %p44, %s46, %s37
      %p48 = scmp.ge.s32.totalorder %s47, 2
      %s49 = scalar_select %p48, 0, %s47
      %s50 = ssub.s32 %s37, %s49
      %s51 = ssub.s32 %s38, %s45
      %s52 = sor.u32 %s50, %s51
      %p53 = scmp.eq.s32.totalorder %s52, 0
      %s55 = sadd.s32 %s54, 1
      %s56 = scalar_select %p53, %s54, %s55
      %p59 = pneg %p53
      %p60 = scmp.eq.s32.totalorder %s30, 1
      %p61 = por %p59, %p60
      %p62 = scmp.ne.s32.totalorder %s54, %s57
      %p63 = scmp.eq.s32.totalorder %s30, 0
      %p64 = por %p62, %p63
      %p65 = scmp.ne.s32.totalorder %s54, %s57
      %p66 = scmp.eq.s32.totalorder %s35, 1
      %p67 = por %p65, %p66
      %p68 = scmp.ne.s32.totalorder %s57, %s58
      %p69 = scmp.eq.s32.totalorder %s35, 0
      %p70 = por %p68, %p69
      %p71 = scmp.ne.s32.totalorder %s57, %s58
      %p72 = scmp.eq.s32.totalorder %s36, 1
      %p73 = por %p71, %p72
      %p75 = scmp.ne.s32.totalorder %s58, %s74
      %p76 = scmp.eq.s32.totalorder %s36, 0
      %p77 = por %p75, %p76
      %s79 = sadd.s32 %s78, 1
      %p82 = scmp.eq.s32.totalorder %s30, 1
      %p83 = scmp.ne.s32.totalorder %s78, %s80
      %p84 = scmp.eq.s32.totalorder %s30, 0
      %p85 = por %p83, %p84
      %p86 = scmp.ne.s32.totalorder %s78, %s80
      %p87 = scmp.eq.s32.totalorder %s35, 1
      %p88 = por %p86, %p87
      %p89 = scmp.ne.s32.totalorder %s80, %s81
      %p90 = scmp.eq.s32.totalorder %s35, 0
      %p91 = por %p89, %p90
      %p92 = scmp.ne.s32.totalorder %s80, %s81
      %p93 = scmp.eq.s32.totalorder %s36, 1
      %p94 = por %p92, %p93
      %p96 = scmp.ne.s32.totalorder %s81, %s95
      %p97 = scmp.eq.s32.totalorder %s36, 0
      %p98 = por %p96, %p97
      %s100 = sadd.s32 %s99, 1
      %p103 = scmp.eq.s32.totalorder %s30, 1
      %p104 = scmp.ne.s32.totalorder %s99, %s101
      %p105 = scmp.eq.s32.totalorder %s30, 0
      %p106 = por %p104, %p105
      %p107 = scmp.ne.s32.totalorder %s99, %s101
      %p108 = scmp.eq.s32.totalorder %s35, 1
      %p109 = por %p107, %p108
      %p110 = scmp.ne.s32.totalorder %s101, %s102
      %p111 = scmp.eq.s32.totalorder %s35, 0
      %p112 = por %p110, %p111
      %p113 = scmp.ne.s32.totalorder %s101, %s102
      %p114 = scmp.eq.s32.totalorder %s36, 1
      %p115 = por %p113, %p114
      %p117 = scmp.ne.s32.totalorder %s102, %s116
      %p118 = scmp.eq.s32.totalorder %s36, 0
      %p119 = por %p117, %p118
      %s121 = sadd.s32 %s120, 1
      %p124 = scmp.eq.s32.totalorder %s30, 1
      %p125 = scmp.ne.s32.totalorder %s120, %s122
      %p126 = scmp.eq.s32.totalorder %s30, 0
      %p127 = por %p125, %p126
      %p128 = scmp.ne.s32.totalorder %s120, %s122
      %p129 = scmp.eq.s32.totalorder %s35, 1
      %p130 = por %p128, %p129
      %p131 = scmp.ne.s32.totalorder %s122, %s123
      %p132 = scmp.eq.s32.totalorder %s35, 0
      %p133 = por %p131, %p132
      %p134 = scmp.ne.s32.totalorder %s122, %s123
      %p135 = scmp.eq.s32.totalorder %s36, 1
      %p136 = por %p134, %p135
      %p138 = scmp.ne.s32.totalorder %s123, %s137
      %p139 = scmp.eq.s32.totalorder %s36, 0
      %p140 = por %p138, %p139
      %s142 = sadd.s32 %s141, 1
      %p145 = scmp.eq.s32.totalorder %s30, 1
      %p146 = scmp.ne.s32.totalorder %s141, %s143
      %p147 = scmp.eq.s32.totalorder %s30, 0
      %p148 = por %p146, %p147
      %p149 = scmp.ne.s32.totalorder %s141, %s143
      %p150 = scmp.eq.s32.totalorder %s35, 1
      %p151 = por %p149, %p150
      %p152 = scmp.ne.s32.totalorder %s143, %s144
      %p153 = scmp.eq.s32.totalorder %s35, 0
      %p154 = por %p152, %p153
      %p155 = scmp.ne.s32.totalorder %s143, %s144
      %p156 = scmp.eq.s32.totalorder %s36, 1
      %p157 = por %p155, %p156
      %p159 = scmp.ne.s32.totalorder %s144, %s158
      %p160 = scmp.eq.s32.totalorder %s36, 0
      %p161 = por %p159, %p160
      %s163 = sadd.s32 %s162, 1
      %p166 = scmp.eq.s32.totalorder %s30, 1
      %p167 = scmp.ne.s32.totalorder %s162, %s164
      %p168 = scmp.eq.s32.totalorder %s30, 0
      %p169 = por %p167, %p168
      %p170 = scmp.ne.s32.totalorder %s162, %s164
      %p171 = scmp.eq.s32.totalorder %s35, 1
      %p172 = por %p170, %p171
      %p173 = scmp.ne.s32.totalorder %s164, %s165
      %p174 = scmp.eq.s32.totalorder %s35, 0
      %p175 = por %p173, %p174
      %p176 = scmp.ne.s32.totalorder %s164, %s165
      %p177 = scmp.eq.s32.totalorder %s36, 1
      %p178 = por %p176, %p177
      %p180 = scmp.ne.s32.totalorder %s165, %s179
      %p181 = scmp.eq.s32.totalorder %s36, 0
      %p182 = por %p180, %p181
      %s184 = sadd.s32 %s183, 1
      %p187 = scmp.eq.s32.totalorder %s30, 1
      %p188 = scmp.ne.s32.totalorder %s183, %s185
      %p189 = scmp.eq.s32.totalorder %s30, 0
      %p190 = por %p188, %p189
      %p191 = scmp.ne.s32.totalorder %s183, %s185
      %p192 = scmp.eq.s32.totalorder %s35, 1
      %p193 = por %p191, %p192
      %p194 = scmp.ne.s32.totalorder %s185, %s186
      %p195 = scmp.eq.s32.totalorder %s35, 0
      %p196 = por %p194, %p195
      %p197 = scmp.ne.s32.totalorder %s185, %s186
      %p198 = scmp.eq.s32.totalorder %s36, 1
      %p199 = por %p197, %p198
      %p201 = scmp.ne.s32.totalorder %s186, %s200
      %p202 = scmp.eq.s32.totalorder %s36, 0
      %p203 = por %p201, %p202
      %s205 = sadd.s32 %s204, 1
      %p208 = scmp.eq.s32.totalorder %s30, 1
      %p209 = scmp.ne.s32.totalorder %s204, %s206
      %p210 = scmp.eq.s32.totalorder %s30, 0
      %p211 = por %p209, %p210
      %p212 = scmp.ne.s32.totalorder %s204, %s206
      %p213 = scmp.eq.s32.totalorder %s35, 1
      %p214 = por %p212, %p213
      %p215 = scmp.ne.s32.totalorder %s206, %s207
      %p216 = scmp.eq.s32.totalorder %s35, 0
      %p217 = por %p215, %p216
      %p218 = scmp.ne.s32.totalorder %s206, %s207
      %p219 = scmp.eq.s32.totalorder %s36, 1
      %p220 = por %p218, %p219
      %p222 = scmp.ne.s32.totalorder %s207, %s221
      %p223 = scmp.eq.s32.totalorder %s36, 0
      %p224 = por %p222, %p223
      %s226 = sadd.s32 %s225, 1
      %p229 = scmp.eq.s32.totalorder %s30, 1
      %p230 = scmp.ne.s32.totalorder %s225, %s227
      %p231 = scmp.eq.s32.totalorder %s30, 0
      %p232 = por %p230, %p231
      %p233 = scmp.ne.s32.totalorder %s225, %s227
      %p234 = scmp.eq.s32.totalorder %s35, 1
      %p235 = por %p233, %p234
      %p236 = scmp.ne.s32.totalorder %s227, %s228
      %p237 = scmp.eq.s32.totalorder %s35, 0
      %p238 = por %p236, %p237
      %p239 = scmp.ne.s32.totalorder %s227, %s228
      %p240 = scmp.eq.s32.totalorder %s36, 1
      %p241 = por %p239, %p240
      %p243 = scmp.ne.s32.totalorder %s228, %s242
      %p244 = scmp.eq.s32.totalorder %s36, 0
      %p245 = por %p243, %p244
      %s246 = ssub.s32 %s37, %s49
      %s247 = ssub.s32 %s38, %s45
      %s248 = sor.u32 %s246, %s247
      %p249 = scmp.eq.s32.totalorder %s248, 0
      %s251 = sadd.s32 %s250, 1
      %s252 = scalar_select %p249, %s250, %s251
      %p255 = pneg %p249
      %p256 = scmp.eq.s32.totalorder %s30, 1
      %p257 = por %p255, %p256
      %p258 = scmp.ne.s32.totalorder %s250, %s253
      %p259 = scmp.eq.s32.totalorder %s30, 0
      %p260 = por %p258, %p259
      %p261 = scmp.ne.s32.totalorder %s250, %s253
      %p262 = scmp.eq.s32.totalorder %s35, 1
      %p263 = por %p261, %p262
      %p264 = scmp.ne.s32.totalorder %s253, %s254
      %p265 = scmp.eq.s32.totalorder %s35, 0
      %p266 = por %p264, %p265
      %p267 = scmp.ne.s32.totalorder %s253, %s254
      %p268 = scmp.eq.s32.totalorder %s36, 1
      %p269 = por %p267, %p268
      %p271 = scmp.ne.s32.totalorder %s254, %s270
      %p272 = scmp.eq.s32.totalorder %s36, 0
      %p273 = por %p271, %p272
      %s274 = ssub.s32 %s37, %s49
      %s275 = ssub.s32 %s38, %s45
      %s276 = sor.u32 %s274, %s275
      %p277 = scmp.eq.s32.totalorder %s276, 0
      %s279 = sadd.s32 %s278, 1
      %s280 = scalar_select %p277, %s278, %s279
      %p283 = pneg %p277
      %p284 = scmp.eq.s32.totalorder %s30, 1
      %p285 = por %p283, %p284
      %p286 = scmp.ne.s32.totalorder %s278, %s281
      %p287 = scmp.eq.s32.totalorder %s30, 0
      %p288 = por %p286, %p287
      %p289 = scmp.ne.s32.totalorder %s278, %s281
      %p290 = scmp.eq.s32.totalorder %s35, 1
      %p291 = por %p289, %p290
      %p292 = scmp.ne.s32.totalorder %s281, %s282
      %p293 = scmp.eq.s32.totalorder %s35, 0
      %p294 = por %p292, %p293
      %p295 = scmp.ne.s32.totalorder %s281, %s282
      %p296 = scmp.eq.s32.totalorder %s36, 1
      %p297 = por %p295, %p296
      %p299 = scmp.ne.s32.totalorder %s282, %s298
      %p300 = scmp.eq.s32.totalorder %s36, 0
      %p301 = por %p299, %p300
      %s302 = ssub.s32 %s37, %s49
      %s303 = ssub.s32 %s38, %s45
      %s304 = sor.u32 %s302, %s303
      %p305 = scmp.eq.s32.totalorder %s304, 0
      %s307 = sadd.s32 %s306, 1
      %s308 = scalar_select %p305, %s306, %s307
      %p311 = pneg %p305
      %p312 = scmp.eq.s32.totalorder %s30, 1
      %p313 = por %p311, %p312
      %p314 = scmp.ne.s32.totalorder %s306, %s309
      %p315 = scmp.eq.s32.totalorder %s30, 0
      %p316 = por %p314, %p315
      %p317 = scmp.ne.s32.totalorder %s306, %s309
      %p318 = scmp.eq.s32.totalorder %s35, 1
      %p319 = por %p317, %p318
      %p320 = scmp.ne.s32.totalorder %s309, %s310
      %p321 = scmp.eq.s32.totalorder %s35, 0
      %p322 = por %p320, %p321
      %p323 = scmp.ne.s32.totalorder %s309, %s310
      %p324 = scmp.eq.s32.totalorder %s36, 1
      %p325 = por %p323, %p324
      %p327 = scmp.ne.s32.totalorder %s310, %s326
      %p328 = scmp.eq.s32.totalorder %s36, 0
      %p329 = por %p327, %p328
      %s330 = ssub.s32 %s37, %s49
      %s331 = ssub.s32 %s38, %s45
      %s332 = sor.u32 %s330, %s331
      %p333 = scmp.eq.s32.totalorder %s332, 0
      %s335 = sadd.s32 %s334, 1
      %s336 = scalar_select %p333, %s334, %s335
      %p339 = pneg %p333
      %p340 = scmp.eq.s32.totalorder %s30, 1
      %p341 = por %p339, %p340
      %p342 = scmp.ne.s32.totalorder %s334, %s337
      %p343 = scmp.eq.s32.totalorder %s30, 0
      %p344 = por %p342, %p343
      %p345 = scmp.ne.s32.totalorder %s334, %s337
      %p346 = scmp.eq.s32.totalorder %s35, 1
      %p347 = por %p345, %p346
      %p348 = scmp.ne.s32.totalorder %s337, %s338
      %p349 = scmp.eq.s32.totalorder %s35, 0
      %p350 = por %p348, %p349
      %p351 = scmp.ne.s32.totalorder %s337, %s338
      %p352 = scmp.eq.s32.totalorder %s36, 1
      %p353 = por %p351, %p352
      %p355 = scmp.ne.s32.totalorder %s338, %s354
      %p356 = scmp.eq.s32.totalorder %s36, 0
      %p357 = por %p355, %p356
      %p358 = scmp.le.s32.totalorder 1, %s30
      %p359 = scmp.lt.s32.totalorder %s30, 3
      %p360 = pnand %p358, %p359
      %p361 = pneg %p360
      // Predicated region
      $region9: #{tpu_custom_call.1} parent=5 // pred_check
        _
      $region10: #{tpu_custom_call.1} parent=5 // pred_check_branch
        %363 = sbr.rel (%p360) target = $region12
      $region11: #{tpu_custom_call.1} parent=5 // pred_region
        %s364 = ssub.s32 %s30, 1
        // Predicated region
        $region13: #{tpu_custom_call.1} parent=11 // pred_check
          %p365 = pneg %p91
        $region14: #{tpu_custom_call.1} parent=11 // pred_check_branch
          %367 = sbr.rel (%p365) target = $region16
        $region15: #{tpu_custom_call.1} parent=11 // pred_region
          _
        $region16: #{tpu_custom_call.1} parent=11 // pred_fallthru
          _
        // Predicated region
        $region17: #{tpu_custom_call.1} parent=11 // pred_check
          %p368 = pneg %p112
        $region18: #{tpu_custom_call.1} parent=11 // pred_check_branch
          %370 = sbr.rel (%p368) target = $region20
        $region19: #{tpu_custom_call.1} parent=11 // pred_region
          _
        $region20: #{tpu_custom_call.1} parent=11 // pred_fallthru
          _
        // Predicated region
        $region21: #{tpu_custom_call.1} parent=11 // pred_check
          %p371 = pneg %p133
        $region22: #{tpu_custom_call.1} parent=11 // pred_check_branch
          %373 = sbr.rel (%p371) target = $region24
        $region23: #{tpu_custom_call.1} parent=11 // pred_region
          _
        $region24: #{tpu_custom_call.1} parent=11 // pred_fallthru
          _
        // Predicated region
        $region25: #{tpu_custom_call.1} parent=11 // pred_check
          %p374 = pneg %p154
        $region26: #{tpu_custom_call.1} parent=11 // pred_check_branch
          %376 = sbr.rel (%p374) target = $region28
        $region27: #{tpu_custom_call.1} parent=11 // pred_region
          %378 = vsyncadd [#allocation3], 0
          %s379 = sshll.u32 %s4, 4
          %s380 = int_to_ptr.hbm [resolvable:$true] %s379
          %s381 = sshll.u32 [#allocation2], 4
          %s382 = int_to_ptr.vmem [resolvable:$true] %s381
          %387 = dma.hbm_to_vmem [thread:$0]  %s380, 512, %s382, [#allocation3], 128, 128, 8
        $region28: #{tpu_custom_call.1} parent=11 // pred_fallthru
          _
        // Predicated region
        $region29: #{tpu_custom_call.1} parent=11 // pred_check
          %p388 = pneg %p175
        $region30: #{tpu_custom_call.1} parent=11 // pred_check_branch
          %390 = sbr.rel (%p388) target = $region32
        $region31: #{tpu_custom_call.1} parent=11 // pred_region
          %392 = vsyncadd [#allocation6], 0
          %s393 = sshll.u32 %s5, 4
          %s394 = int_to_ptr.hbm [resolvable:$true] %s393
          %s395 = sshll.u32 [#allocation5], 4
          %s396 = int_to_ptr.vmem [resolvable:$true] %s395
          %401 = dma.hbm_to_vmem [thread:$0]  %s394, 512, %s396, [#allocation6], 128, 128, 8
        $region32: #{tpu_custom_call.1} parent=11 // pred_fallthru
          _
        // Predicated region
        $region33: #{tpu_custom_call.1} parent=11 // pred_check
          %p402 = pneg %p196
        $region34: #{tpu_custom_call.1} parent=11 // pred_check_branch
          %404 = sbr.rel (%p402) target = $region36
        $region35: #{tpu_custom_call.1} parent=11 // pred_region
          _
        $region36: #{tpu_custom_call.1} parent=11 // pred_fallthru
          _
        // Predicated region
        $region37: #{tpu_custom_call.1} parent=11 // pred_check
          %p405 = pneg %p217
        $region38: #{tpu_custom_call.1} parent=11 // pred_check_branch
          %407 = sbr.rel (%p405) target = $region40
        $region39: #{tpu_custom_call.1} parent=11 // pred_region
          _
        $region40: #{tpu_custom_call.1} parent=11 // pred_fallthru
          _
        // Predicated region
        $region41: #{tpu_custom_call.1} parent=11 // pred_check
          %p408 = pneg %p238
        $region42: #{tpu_custom_call.1} parent=11 // pred_check_branch
          %410 = sbr.rel (%p408) target = $region44
        $region43: #{tpu_custom_call.1} parent=11 // pred_region
          _
        $region44: #{tpu_custom_call.1} parent=11 // pred_fallthru
          _
      $region12: #{tpu_custom_call.1} parent=5 // pred_fallthru
        _
      %p411 = scmp.lt.s32.totalorder %s30, 2
      // Predicated region
      $region45: #{tpu_custom_call.1} parent=5 // pred_check
        %p412 = pneg %p411
      $region46: #{tpu_custom_call.1} parent=5 // pred_check_branch
        %414 = sbr.rel (%p412) target = $region48
      $region47: #{tpu_custom_call.1} parent=5 // pred_region
        // Predicated region
        $region49: #{tpu_custom_call.1} parent=47 // pred_check
          %p415 = pneg %p64
        $region50: #{tpu_custom_call.1} parent=47 // pred_check_branch
          %417 = sbr.rel (%p415) target = $region52
        $region51: #{tpu_custom_call.1} parent=47 // pred_region
          %p418 = scmp.lt.s32.totalorder %s37, 1
          %s419 = scalar_select %p418, %s37, 1
          %p420 = scmp.lt.s32.totalorder %s38, 0
          %s421 = scalar_select %p420, %s38, 0
          %s422 = sadd.s32 %s421, %s419
          %s423 = smul.addr %s422, 8
          %s424 = scalar_lea.vmem %s0, %s423
        $region52: #{tpu_custom_call.1} parent=47 // pred_fallthru
          _
      $region48: #{tpu_custom_call.1} parent=5 // pred_fallthru
        _
      %p425 = scmp.le.s32.totalorder 1, %s30
      %p426 = scmp.lt.s32.totalorder %s30, 3
      %p427 = pnand %p425, %p426
      %p428 = pneg %p427
      // Predicated region
      $region53: #{tpu_custom_call.1} parent=5 // pred_check
        _
      $region54: #{tpu_custom_call.1} parent=5 // pred_check_branch
        %430 = sbr.rel (%p427) target = $region56
      $region55: #{tpu_custom_call.1} parent=5 // pred_region
        %s431 = ssub.s32 %s30, 1
        // Predicated region
        $region57: #{tpu_custom_call.1} parent=55 // pred_check
          %p432 = pneg %p154
        $region58: #{tpu_custom_call.1} parent=55 // pred_check_branch
          %434 = sbr.rel (%p432) target = $region60
        $region59: #{tpu_custom_call.1} parent=55 // pred_region
          %436 = dma.done [#allocation3], 512
        $region60: #{tpu_custom_call.1} parent=55 // pred_fallthru
          _
        // Predicated region
        $region61: #{tpu_custom_call.1} parent=55 // pred_check
          %p437 = pneg %p175
        $region62: #{tpu_custom_call.1} parent=55 // pred_check_branch
          %439 = sbr.rel (%p437) target = $region64
        $region63: #{tpu_custom_call.1} parent=55 // pred_region
          %441 = dma.done [#allocation6], 512
        $region64: #{tpu_custom_call.1} parent=55 // pred_fallthru
          _
        %p442 = scmp.lt.s32.totalorder %s39, 1
        %s443 = scalar_select %p442, %s39, 1
        %p444 = scmp.lt.s32.totalorder %s40, 0
        %s445 = scalar_select %p444, %s40, 0
        %s446 = sadd.s32 %s445, %s443
        %s447 = smul.addr %s446, 8
        %s448 = scalar_lea.vmem %s0, %s447
        %p449 = pneg %p70
        %p450 = pneg %p67
        %p451 = pneg %p91
        %p452 = pneg %p88
        %p453 = pneg %p112
        %p454 = pneg %p109
        %p455 = pneg %p133
        %p456 = pneg %p130
        %p457 = pneg %p154
        %p458 = pneg %p151
        %p459 = pneg %p175
        %p460 = pneg %p172
        %p461 = pneg %p196
        %p462 = pneg %p193
        %p463 = pneg %p217
        %p464 = pneg %p214
        %p465 = pneg %p238
        %p466 = pneg %p235
        %p467 = pneg %p266
        %p468 = pneg %p263
        %s469 = sand.u32 %s253, 1
        %s470 = scalar_lea.sflag [#allocation4], %s469
        %s471 = sand.u32 %s253, 1
        %s472 = smul.addr %s471, 8
        %s473 = scalar_lea.vmem [#allocation7], %s472
        %p474 = pneg %p294
        %p475 = pneg %p291
        %s476 = sand.u32 %s35, 1
        %s477 = scalar_lea.sflag [#allocation9], %s476
        %s478 = sand.u32 %s281, 1
        %s479 = smul.addr %s478, 8
        %s480 = scalar_lea.vmem [#allocation8], %s479
        %p481 = pneg %p322
        %p482 = pneg %p319
        %s483 = sand.u32 %s35, 1
        %s484 = scalar_lea.sflag [#allocation9], %s483
        %s485 = sand.u32 %s309, 1
        %s486 = smul.addr %s485, 8
        %s487 = scalar_lea.vmem [#allocation10], %s486
        %p488 = pneg %p350
        %p489 = pneg %p347
        %s490 = sand.u32 %s337, 1
        %s491 = scalar_lea.sflag [#allocation12], %s490
        %s492 = sand.u32 %s337, 1
        %s493 = smul.addr %s492, 8
        %s494 = scalar_lea.vmem [#allocation11], %s493
        %p495 = scmp.lt.s32.totalorder %s39, 1
        %s496 = scalar_select %p495, %s39, 1
        %p497 = scmp.lt.s32.totalorder %s40, 0
        %s498 = scalar_select %p497, %s40, 0
        %s499 = sadd.s32 %s498, %s496
        %s500 = smul.addr %s499, 8
        %s501 = scalar_lea.vmem %s0, %s500
        %v502 = vld [vmem:[%s501] sm:$0xff]
        %v503 = vld [vmem:[%s1] sm:$0x1]
        %v504 = vld [vmem:[%s2] sm:$0x1]
        %vm505 = vcmask 261120
        %v506 = vsel %vm505, %v502, 0.0
        %507 = vadd.xlane.f32.xlu0 %v506
        %v508 = vpop.xlane.xlu0 %507
        %v509 = vrcp.pop 32.0
        %v510 = vmul.f32 32.0, %v509
        %v511 = vsub.f32 1.0, %v510
        %v512 = vmul.f32 %v509, %v511
        %v513 = vadd.f32 %v509, %v512
        %vm514 = vweird.f32 %v509
        %v515 = vsel %vm514, %v509, %v513
        %v516 = vmul.f32 %v508, %v515
        %v517 = vsub.f32 %v502, %v516
        %v518 = vmul.f32 %v517, %v517
        %v519 = vsel %vm505, %v518, 0.0
        %520 = vadd.xlane.f32.xlu0 %v519
        %v521 = vpop.xlane.xlu0 %520
        %v522 = vmul.f32 %v521, %v515
        %v523 = vadd.f32 %v522, 1e-05
        %v524 = vrsqrt.pop %v523
        %v525 = vmul.f32 %v524, %v523
        %v526 = vmul.f32 %v525, %v524
        %v527 = vmul.f32 0.5, %v526
        %v528 = vsub.f32 1.5, %v527
        %v529 = vmul.f32 %v524, %v528
        %vm530 = vweird.f32 %v523
        %vm531 = vweird.f32 %v524
        %vm532 = vmor %vm530, %vm531
        %v533 = vsel %vm532, %v524, %v529
        %v534 = vmul.f32 %v517, %v533
        %v536 = vperm.slane %v503, 0
        %v538 = vmul.f32 %v534, %v536
        %v540 = vperm.slane %v504, 0
        %v542 = vadd.f32 %v538, %v540
        %v543 = vld [vmem:[%s3] sm:$0xff]
        %v544 = vld [vmem:[%s3 + $0x8] sm:$0xff]
        %v545 = vld [vmem:[%s3 + $0x10] sm:$0xff]
        %v546 = vld [vmem:[%s3 + $0x18] sm:$0xff]
        %v548 = vsel %vm505, %v542, 0
        %550 = vmatpush.msra.mxu0 0.0
        %551 = vmatpush.msra.mxu0 0.0
        %552 = vmatpush.msra.mxu0 0.0
        %553 = vmatpush.msra.mxu0 0.0
        %554 = vmatpush.msra.mxu0 0.0
        %555 = vmatpush.msra.mxu0 0.0
        %556 = vmatpush.msra.mxu0 0.0
        %557 = vmatpush.msra.mxu0 0.0
        %558 = vmatpush.msra.mxu0 0.0
        %559 = vmatpush.msra.mxu0 0.0
        %560 = vmatpush.msra.mxu0 0.0
        %561 = vmatpush.msra.mxu0 0.0
        %562 = vmatpush.msra.mxu0 %v546
        %563 = vmatpush.msra.mxu0 %v545
        %564 = vmatpush.msra.mxu0 %v544
        %565 = vmatpush.msra.mxu0 %v543
        %566 = vmatmul.f32.gmra.mxu0 %v548
        %v567 = vpop.f32.mrf.mxu0
        %v568 = vadd.f32 0.0, %v567
        %569 = vdwg.mxu0
        %v570 = vmul.f32 %v568, 0.25
        %v571 = vld [vmem:[#allocation2] sm:$0xff]
        %v572 = vld [vmem:[#allocation2 + $0x8] sm:$0xff]
        %v573 = vld [vmem:[#allocation2 + $0x10] sm:$0xff]
        %v574 = vld [vmem:[#allocation2 + $0x18] sm:$0xff]
        %575 = vmatpush.msra.mxu0 0.0
        %576 = vmatpush.msra.mxu0 0.0
        %577 = vmatpush.msra.mxu0 0.0
        %578 = vmatpush.msra.mxu0 0.0
        %579 = vmatpush.msra.mxu0 0.0
        %580 = vmatpush.msra.mxu0 0.0
        %581 = vmatpush.msra.mxu0 0.0
        %582 = vmatpush.msra.mxu0 0.0
        %583 = vmatpush.msra.mxu0 0.0
        %584 = vmatpush.msra.mxu0 0.0
        %585 = vmatpush.msra.mxu0 0.0
        %586 = vmatpush.msra.mxu0 0.0
        %587 = vmatpush.msra.mxu0 %v574
        %588 = vmatpush.msra.mxu0 %v573
        %589 = vmatpush.msra.mxu0 %v572
        %590 = vmatpush.msra.mxu0 %v571
        %591 = vmatmul.f32.gmra.mxu0 %v548
        %v592 = vpop.f32.mrf.mxu0
        %v593 = vadd.f32 0.0, %v592
        %594 = vdwg.mxu0
        %595 = vst.msk [vmem:[%s487] sm:$0xff] %vm505, %v593
        %v596 = vld [vmem:[#allocation5] sm:$0xff]
        %v597 = vld [vmem:[#allocation5 + $0x8] sm:$0xff]
        %v598 = vld [vmem:[#allocation5 + $0x10] sm:$0xff]
        %v599 = vld [vmem:[#allocation5 + $0x18] sm:$0xff]
        %600 = vmatpush.msra.mxu0 0.0
        %601 = vmatpush.msra.mxu0 0.0
        %602 = vmatpush.msra.mxu0 0.0
        %603 = vmatpush.msra.mxu0 0.0
        %604 = vmatpush.msra.mxu0 0.0
        %605 = vmatpush.msra.mxu0 0.0
        %606 = vmatpush.msra.mxu0 0.0
        %607 = vmatpush.msra.mxu0 0.0
        %608 = vmatpush.msra.mxu0 0.0
        %609 = vmatpush.msra.mxu0 0.0
        %610 = vmatpush.msra.mxu0 0.0
        %611 = vmatpush.msra.mxu0 0.0
        %612 = vmatpush.msra.mxu0 %v599
        %613 = vmatpush.msra.mxu0 %v598
        %614 = vmatpush.msra.mxu0 %v597
        %615 = vmatpush.msra.mxu0 %v596
        %616 = vmatmul.f32.gmra.mxu0 %v548
        %v617 = vpop.f32.mrf.mxu0
        %v618 = vadd.f32 0.0, %v617
        %619 = vdwg.mxu0
        %620 = vst.msk [vmem:[%s494] sm:$0xff] %vm505, %v618
        %v621 = vld [vmem:[%s7] sm:$0x1]
        %v623 = vperm.slane %v621, 0
        %v625 = vadd.f32 %v570, %v623
        %626 = vst.msk [vmem:[%s473] sm:$0xff] %vm505, %v625
        %v627 = vld [vmem:[%s8] sm:$0x1]
        %v629 = vperm.slane %v627, 0
        %v631 = vadd.f32 %v570, %v629
        %v632 = vld [vmem:[%s6] sm:$0xff]
        %v633 = vld [vmem:[%s6 + $0x8] sm:$0xff]
        %v634 = vld [vmem:[%s6 + $0x10] sm:$0xff]
        %v635 = vld [vmem:[%s6 + $0x18] sm:$0xff]
        %v637 = vsel %vm505, %v631, 0
        %639 = vmatpush.msra.mxu0 0.0
        %640 = vmatpush.msra.mxu0 0.0
        %641 = vmatpush.msra.mxu0 0.0
        %642 = vmatpush.msra.mxu0 0.0
        %643 = vmatpush.msra.mxu0 0.0
        %644 = vmatpush.msra.mxu0 0.0
        %645 = vmatpush.msra.mxu0 0.0
        %646 = vmatpush.msra.mxu0 0.0
        %647 = vmatpush.msra.mxu0 0.0
        %648 = vmatpush.msra.mxu0 0.0
        %649 = vmatpush.msra.mxu0 0.0
        %650 = vmatpush.msra.mxu0 0.0
        %651 = vmatpush.msra.mxu0 %v635
        %652 = vmatpush.msra.mxu0 %v634
        %653 = vmatpush.msra.mxu0 %v633
        %654 = vmatpush.msra.mxu0 %v632
        %655 = vmatmul.f32.gmra.mxu0 %v637
        %v656 = vpop.f32.mrf.mxu0
        %v657 = vadd.f32 0.0, %v656
        %658 = vdwg.mxu0
        %vm659 = vcmask 130048
        %660 = vst.msk [vmem:[%s480] sm:$0xff] %vm659, %v657
        %s661 = sand.u32 %s253, 1
        %s662 = scalar_lea.sflag [#allocation4], %s661
        %s663 = sand.u32 %s253, 1
        %s664 = smul.addr %s663, 8
        %s665 = scalar_lea.vmem [#allocation7], %s664
        %s666 = sand.u32 %s35, 1
        %s667 = scalar_lea.sflag [#allocation9], %s666
        %s668 = sand.u32 %s281, 1
        %s669 = smul.addr %s668, 8
        %s670 = scalar_lea.vmem [#allocation8], %s669
        %s671 = sand.u32 %s35, 1
        %s672 = scalar_lea.sflag [#allocation9], %s671
        %s673 = sand.u32 %s309, 1
        %s674 = smul.addr %s673, 8
        %s675 = scalar_lea.vmem [#allocation10], %s674
        %s676 = sand.u32 %s337, 1
        %s677 = scalar_lea.sflag [#allocation12], %s676
        %s678 = sand.u32 %s337, 1
        %s679 = smul.addr %s678, 8
        %s680 = scalar_lea.vmem [#allocation11], %s679
        // Predicated region
        $region65: #{tpu_custom_call.1} parent=55 // pred_check
          %p681 = pneg %p263
        $region66: #{tpu_custom_call.1} parent=55 // pred_check_branch
          %683 = sbr.rel (%p681) target = $region68
        $region67: #{tpu_custom_call.1} parent=55 // pred_region
          %685 = vsyncadd %s662, 0
          %s686 = sadd.s32 %s40, %s39
          %s687 = smul.addr %s686, 8
          %s688 = scalar_lea.hbm %s9, %s687
          %s690 = sshll.u32 %s665, 4
          %s691 = int_to_ptr.vmem [resolvable:$true] %s690
          %s692 = sshll.u32 %s688, 4
          %s693 = int_to_ptr.hbm [resolvable:$true] %s692
          %695 = dma.vmem_to_hbm [thread:$0]  %s691, 128, %s693, %s662
        $region68: #{tpu_custom_call.1} parent=55 // pred_fallthru
          _
        // Predicated region
        $region69: #{tpu_custom_call.1} parent=55 // pred_check
          %p696 = pneg %p291
        $region70: #{tpu_custom_call.1} parent=55 // pred_check_branch
          %698 = sbr.rel (%p696) target = $region72
        $region71: #{tpu_custom_call.1} parent=55 // pred_region
          %700 = vsyncadd %s667, 0
          %s701 = sadd.s32 %s40, %s39
          %s702 = smul.addr %s701, 8
          %s703 = scalar_lea.hbm %s10, %s702
          %s705 = sshll.u32 %s670, 4
          %s706 = int_to_ptr.vmem [resolvable:$true] %s705
          %s707 = sshll.u32 %s703, 4
          %s708 = int_to_ptr.hbm [resolvable:$true] %s707
          %710 = dma.vmem_to_hbm [thread:$0]  %s706, 128, %s708, %s667
        $region72: #{tpu_custom_call.1} parent=55 // pred_fallthru
          _
        // Predicated region
        $region73: #{tpu_custom_call.1} parent=55 // pred_check
          %p711 = pneg %p319
        $region74: #{tpu_custom_call.1} parent=55 // pred_check_branch
          %713 = sbr.rel (%p711) target = $region76
        $region75: #{tpu_custom_call.1} parent=55 // pred_region
          %715 = vsyncadd %s672, 0
          %s716 = sadd.s32 %s40, %s39
          %s717 = smul.addr %s716, 8
          %s718 = scalar_lea.hbm %s11, %s717
          %s720 = sshll.u32 %s675, 4
          %s721 = int_to_ptr.vmem [resolvable:$true] %s720
          %s722 = sshll.u32 %s718, 4
          %s723 = int_to_ptr.hbm [resolvable:$true] %s722
          %725 = dma.vmem_to_hbm [thread:$0]  %s721, 128, %s723, %s672
        $region76: #{tpu_custom_call.1} parent=55 // pred_fallthru
          _
        // Predicated region
        $region77: #{tpu_custom_call.1} parent=55 // pred_check
          %p726 = pneg %p347
        $region78: #{tpu_custom_call.1} parent=55 // pred_check_branch
          %728 = sbr.rel (%p726) target = $region80
        $region79: #{tpu_custom_call.1} parent=55 // pred_region
          %730 = vsyncadd %s677, 0
          %s731 = sadd.s32 %s40, %s39
          %s732 = smul.addr %s731, 8
          %s733 = scalar_lea.hbm %s12, %s732
          %s735 = sshll.u32 %s680, 4
          %s736 = int_to_ptr.vmem [resolvable:$true] %s735
          %s737 = sshll.u32 %s733, 4
          %s738 = int_to_ptr.hbm [resolvable:$true] %s737
          %740 = dma.vmem_to_hbm [thread:$0]  %s736, 128, %s738, %s677
        $region80: #{tpu_custom_call.1} parent=55 // pred_fallthru
          _
      $region56: #{tpu_custom_call.1} parent=5 // pred_fallthru
        _
      %p741 = scmp.le.s32.totalorder 2, %s30
      // Predicated region
      $region81: #{tpu_custom_call.1} parent=5 // pred_check
        %p742 = pneg %p741
      $region82: #{tpu_custom_call.1} parent=5 // pred_check_branch
        %744 = sbr.rel (%p742) target = $region84
      $region83: #{tpu_custom_call.1} parent=5 // pred_region
        %s745 = ssub.s32 %s30, 2
        // Predicated region
        $region85: #{tpu_custom_call.1} parent=83 // pred_check
          %p746 = pneg %p269
        $region86: #{tpu_custom_call.1} parent=83 // pred_check_branch
          %748 = sbr.rel (%p746) target = $region88
        $region87: #{tpu_custom_call.1} parent=83 // pred_region
          %s749 = sand.u32 %s254, 1
          %s750 = scalar_lea.sflag [#allocation4], %s749
          %s751 = sand.u32 %s254, 1
          %s752 = smul.addr %s751, 8
          %s753 = scalar_lea.vmem [#allocation7], %s752
          %755 = dma.done %s750, 128
        $region88: #{tpu_custom_call.1} parent=83 // pred_fallthru
          _
        // Predicated region
        $region89: #{tpu_custom_call.1} parent=83 // pred_check
          %p756 = pneg %p297
        $region90: #{tpu_custom_call.1} parent=83 // pred_check_branch
          %758 = sbr.rel (%p756) target = $region92
        $region91: #{tpu_custom_call.1} parent=83 // pred_region
          %s759 = sand.u32 %s36, 1
          %s760 = scalar_lea.sflag [#allocation9], %s759
          %s761 = sand.u32 %s282, 1
          %s762 = smul.addr %s761, 8
          %s763 = scalar_lea.vmem [#allocation8], %s762
          %765 = dma.done %s760, 128
        $region92: #{tpu_custom_call.1} parent=83 // pred_fallthru
          _
        // Predicated region
        $region93: #{tpu_custom_call.1} parent=83 // pred_check
          %p766 = pneg %p325
        $region94: #{tpu_custom_call.1} parent=83 // pred_check_branch
          %768 = sbr.rel (%p766) target = $region96
        $region95: #{tpu_custom_call.1} parent=83 // pred_region
          %s769 = sand.u32 %s36, 1
          %s770 = scalar_lea.sflag [#allocation9], %s769
          %s771 = sand.u32 %s310, 1
          %s772 = smul.addr %s771, 8
          %s773 = scalar_lea.vmem [#allocation10], %s772
          %775 = dma.done %s770, 128
        $region96: #{tpu_custom_call.1} parent=83 // pred_fallthru
          _
        // Predicated region
        $region97: #{tpu_custom_call.1} parent=83 // pred_check
          %p776 = pneg %p353
        $region98: #{tpu_custom_call.1} parent=83 // pred_check_branch
          %778 = sbr.rel (%p776) target = $region100
        $region99: #{tpu_custom_call.1} parent=83 // pred_region
          %s779 = sand.u32 %s338, 1
          %s780 = scalar_lea.sflag [#allocation12], %s779
          %s781 = sand.u32 %s338, 1
          %s782 = smul.addr %s781, 8
          %s783 = scalar_lea.vmem [#allocation11], %s782
          %785 = dma.done %s780, 128
        $region100: #{tpu_custom_call.1} parent=83 // pred_fallthru
          _
      $region84: #{tpu_custom_call.1} parent=5 // pred_fallthru
        _
    $region6: #{tpu_custom_call.1} parent=1 // loop_footer
      %s34 = sadd.s32 1, %s30
    $region7: #{tpu_custom_call.1} parent=1 // loop_footer_branch
      %29 = sbr.rel target = $region3
    $region8: #{tpu_custom_call.1} parent=1 // loop_exit
      _
    %786 = vsyncpa [#allocation3], 1
    %s787 = scalar_lea.sflag [#allocation3], 1
    %788 = vsyncpa %s787, 1
    %789 = vsyncpa [#allocation6], 1
    %790 = vsyncpa [#allocation4], 1
    %s791 = scalar_lea.sflag [#allocation4], 1
    %792 = vsyncpa %s791, 1
    %793 = vsyncpa [#allocation9], 1
    %s794 = scalar_lea.sflag [#allocation9], 1
    %795 = vsyncpa %s794, 1
    %796 = vsyncpa [#allocation12], 1
    %s797 = scalar_lea.sflag [#allocation12], 1
    %798 = vsyncpa %s797, 1

</llo_original>
